<compile_context>
chip_gen: v7x
topology: tpu7x:2x2x1
jax: 0.10.0
libtpu: 0.0.40
codegen_flags: <defaults>
</compile_context>

<pallas_src>
import functools

import jax
import jax.numpy as jnp
from jax.experimental import pallas as pl
from jax.experimental.pallas import tpu as pltpu

BN_EPS = 1e-5


# ---------------------------------------------------------------------------
# helpers
# ---------------------------------------------------------------------------

def _pick_batch_tile(B, max_tile=512):
    """Largest 'nice' batch tile dividing B (multiples of 256 preferred for the
    v6e 2x256^2 MXU, 128 still fine for v5e).  Falls back to a single tile."""
    for t in (512, 256, 128, 64, 32, 16, 8):
        if t <= max_tile and B % t == 0:
            return t
    return B  # TODO(synk): pad ragged batches instead of going monolithic.


def _vmem_limit(tile_bytes, resident_bytes):
    """Double-buffered activation tiles + resident params + headroom, clamped
    to 32 MiB so the limit is also safe on v7x (64 MiB physical per TC)."""
    need = 2 * tile_bytes + resident_bytes + (2 << 20)
    return int(min(max(need, 4 << 20), 32 << 20))


def _compiler_params(tile_bytes, resident_bytes):
    return pltpu.CompilerParams(
        dimension_semantics=("parallel",),
        vmem_limit_bytes=_vmem_limit(tile_bytes, resident_bytes),
    )


# ---------------------------------------------------------------------------
# kernels
# ---------------------------------------------------------------------------

def _linear_stats_kernel(x_ref, w_ref, h_ref, psum_ref, psumsq_ref):
    """h = x @ W (bias dropped; cancelled by the following BN).  Emits the
    f32 tile plus per-tile partial sums for the BN statistics."""
    x = x_ref[...].astype(jnp.bfloat16)                       # bf16 MXU operand
    h = jnp.dot(x, w_ref[...], preferred_element_type=jnp.float32)
    h_ref[...] = h
    psum_ref[0] = jnp.sum(h, axis=0, keepdims=True)           # f32 stats
    psumsq_ref[0] = jnp.sum(h * h, axis=0, keepdims=True)


def _bn_relu_linear_stats_kernel(h_ref, sum_ref, sumsq_ref, g_ref, b_ref, w_ref,
                                 o_ref, psum_ref, psumsq_ref, *, inv_b):
    """Apply full-batch BN (folded to one FMA) + relu in f32, cast to bf16,
    matmul into the next layer, and emit that layer's partial stats."""
    mean = sum_ref[...] * inv_b                                # (1, K) f32
    var = jnp.maximum(sumsq_ref[...] * inv_b - mean * mean, 0.0)
    scale = jax.lax.rsqrt(var + BN_EPS) * g_ref[...]
    shift = b_ref[...] - mean * scale
    a = jnp.maximum(h_ref[...] * scale + shift, 0.0)           # f32 BN + relu
    a = a.astype(jnp.bfloat16)                                 # >=0, benign cast
    h = jnp.dot(a, w_ref[...], preferred_element_type=jnp.float32)
    o_ref[...] = h
    psum_ref[0] = jnp.sum(h, axis=0, keepdims=True)
    psumsq_ref[0] = jnp.sum(h * h, axis=0, keepdims=True)


def _bn_relu_linear_tanh_kernel(h_ref, sum_ref, sumsq_ref, g_ref, b_ref, w_ref,
                                bias_ref, o_ref, *, inv_b):
    """Final layer: BN + relu (f32) -> bf16 matmul -> +bias -> tanh (f32)."""
    mean = sum_ref[...] * inv_b
    var = jnp.maximum(sumsq_ref[...] * inv_b - mean * mean, 0.0)
    scale = jax.lax.rsqrt(var + BN_EPS) * g_ref[...]
    shift = b_ref[...] - mean * scale
    a = jnp.maximum(h_ref[...] * scale + shift, 0.0).astype(jnp.bfloat16)
    y = jnp.dot(a, w_ref[...], preferred_element_type=jnp.float32) + bias_ref[...]
    o_ref[...] = jnp.tanh(y)


# ---------------------------------------------------------------------------
# per-layer pallas_call wrappers (grid over batch tiles)
# ---------------------------------------------------------------------------

def _linear_stats(x, w_bf16, tb):
    B, K = x.shape
    N = w_bf16.shape[1]
    nt = B // tb
    tile_bytes = (tb * K + tb * N) * 4
    resident = K * N * 2 + 2 * N * 4
    h, psum, psumsq = pl.pallas_call(
        _linear_stats_kernel,
        out_shape=(jax.ShapeDtypeStruct((B, N), jnp.float32),
                   jax.ShapeDtypeStruct((nt, 1, N), jnp.float32),
                   jax.ShapeDtypeStruct((nt, 1, N), jnp.float32)),
        grid=(nt,),
        in_specs=[pl.BlockSpec((tb, K), lambda i: (i, 0)),
                  pl.BlockSpec((K, N), lambda i: (0, 0))],        # resident
        out_specs=(pl.BlockSpec((tb, N), lambda i: (i, 0)),
                   pl.BlockSpec((1, 1, N), lambda i: (i, 0, 0)),
                   pl.BlockSpec((1, 1, N), lambda i: (i, 0, 0))),
        compiler_params=_compiler_params(tile_bytes, resident),
    )(x, w_bf16)
    # tiny cross-tile reduction of the BN partial statistics
    return h, psum.sum(axis=0), psumsq.sum(axis=0)


def _bn_relu_linear_stats(h, ssum, ssumsq, gamma, beta, w_bf16, tb, inv_b):
    B, K = h.shape
    N = w_bf16.shape[1]
    nt = B // tb
    tile_bytes = (tb * K + tb * N) * 4
    resident = K * N * 2 + 6 * K * 4 + 2 * N * 4
    kern = functools.partial(_bn_relu_linear_stats_kernel, inv_b=inv_b)
    o, psum, psumsq = pl.pallas_call(
        kern,
        out_shape=(jax.ShapeDtypeStruct((B, N), jnp.float32),
                   jax.ShapeDtypeStruct((nt, 1, N), jnp.float32),
                   jax.ShapeDtypeStruct((nt, 1, N), jnp.float32)),
        grid=(nt,),
        in_specs=[pl.BlockSpec((tb, K), lambda i: (i, 0)),
                  pl.BlockSpec((1, K), lambda i: (0, 0)),          # resident
                  pl.BlockSpec((1, K), lambda i: (0, 0)),
                  pl.BlockSpec((1, K), lambda i: (0, 0)),
                  pl.BlockSpec((1, K), lambda i: (0, 0)),
                  pl.BlockSpec((K, N), lambda i: (0, 0))],
        out_specs=(pl.BlockSpec((tb, N), lambda i: (i, 0)),
                   pl.BlockSpec((1, 1, N), lambda i: (i, 0, 0)),
                   pl.BlockSpec((1, 1, N), lambda i: (i, 0, 0))),
        compiler_params=_compiler_params(tile_bytes, resident),
    )(h, ssum, ssumsq, gamma, beta, w_bf16)
    return o, psum.sum(axis=0), psumsq.sum(axis=0)


def _bn_relu_linear_tanh(h, ssum, ssumsq, gamma, beta, w_bf16, bias, tb, inv_b):
    B, K = h.shape
    N = w_bf16.shape[1]
    nt = B // tb
    tile_bytes = (tb * K + tb * N) * 4
    resident = K * N * 2 + 6 * K * 4 + N * 4
    kern = functools.partial(_bn_relu_linear_tanh_kernel, inv_b=inv_b)
    return pl.pallas_call(
        kern,
        out_shape=jax.ShapeDtypeStruct((B, N), jnp.float32),
        grid=(nt,),
        in_specs=[pl.BlockSpec((tb, K), lambda i: (i, 0)),
                  pl.BlockSpec((1, K), lambda i: (0, 0)),          # resident
                  pl.BlockSpec((1, K), lambda i: (0, 0)),
                  pl.BlockSpec((1, K), lambda i: (0, 0)),
                  pl.BlockSpec((1, K), lambda i: (0, 0)),
                  pl.BlockSpec((K, N), lambda i: (0, 0)),
                  pl.BlockSpec((1, N), lambda i: (0, 0))],
        # NOTE: out last-dim (16) < 128 -> masked stores; acceptable at this
        # output width (see review).  Pad w4/b4 to 128 cols if out grows.
        out_specs=pl.BlockSpec((tb, N), lambda i: (i, 0)),
        compiler_params=_compiler_params(tile_bytes, resident),
    )(h, ssum, ssumsq, gamma, beta, w_bf16, bias)


# ---------------------------------------------------------------------------
# full forward
# ---------------------------------------------------------------------------

def model_gx_forward(x, params, *, max_batch_tile=512):
    (w1, _b1, g1, be1,
     w2, _b2, g2, be2,
     w3, _b3, g3, be3,
     w4, b4) = params
    B = x.shape[0]
    tb = _pick_batch_tile(B, max_batch_tile)
    inv_b = 1.0 / B

    # Cast matmul weights to bf16 once; f32 accumulation happens on the MXU.
    w1b, w2b, w3b, w4b = (w.astype(jnp.bfloat16) for w in (w1, w2, w3, w4))

    h1, s1, q1 = _linear_stats(x, w1b, tb)
    h2, s2, q2 = _bn_relu_linear_stats(h1, s1, q1, g1, be1, w2b, tb, inv_b)
    h3, s3, q3 = _bn_relu_linear_stats(h2, s2, q2, g2, be2, w3b, tb, inv_b)
    return _bn_relu_linear_tanh(h3, s3, q3, g3, be3, w4b, b4, tb, inv_b)


# ---------------------------------------------------------------------------
# params + references
# ---------------------------------------------------------------------------

def init_params(key, input_size, output_size):
    """Deterministic synthetic params matching PyTorch init conventions.
    Linear weights stored transposed as (in, out); bias/gamma/beta as (1, N)."""
    ks = jax.random.split(key, 4)

    def linear(k, fan_in, fan_out):
        kw, kb = jax.random.split(k)
        bound = 1.0 / jnp.sqrt(fan_in)
        w = jax.random.uniform(kw, (fan_in, fan_out), jnp.float32, -bound, bound)
        b = jax.random.uniform(kb, (1, fan_out), jnp.float32, -bound, bound)
        return w, b

    w1, b1 = linear(ks[0], input_size, 256)
    w2, b2 = linear(ks[1], 256, 128)
    w3, b3 = linear(ks[2], 128, 256)
    w4, b4 = linear(ks[3], 256, output_size)

    g1, be1 = jnp.ones((1, 256), jnp.float32), jnp.zeros((1, 256), jnp.float32)
    g2, be2 = jnp.ones((1, 128), jnp.float32), jnp.zeros((1, 128), jnp.float32)
    g3, be3 = jnp.ones((1, 256), jnp.float32), jnp.zeros((1, 256), jnp.float32)

    return (w1, b1, g1, be1, w2, b2, g2, be2, w3, b3, g3, be3, w4, b4)


def reference_forward(x, params):
    """Faithful f32 JAX port of the PyTorch forward (training-mode BN, all
    biases included)."""
    (w1, b1, g1, be1,
     w2, b2, g2, be2,
     w3, b3, g3, be3,
     w4, b4) = params

    def bn(h, g, b):
        mean = jnp.mean(h, axis=0, keepdims=True)
        var = jnp.mean((h - mean) ** 2, axis=0, keepdims=True)
        return (h - mean) / jnp.sqrt(var + BN_EPS) * g + b

    h = jnp.maximum(bn(x @ w1 + b1, g1, be1), 0.0)
    h = jnp.maximum(bn(h @ w2 + b2, g2, be2), 0.0)
    h = jnp.maximum(bn(h @ w3 + b3, g3, be3), 0.0)
    return jnp.tanh(h @ w4 + b4)


def reference_forward_bf16(x, params):
    """Mirrors the kernel's numerics exactly: bf16 matmul operands with f32
    accumulation, single-pass f32 BN stats, b1/b2/b3 dropped (exact under
    training-mode BN)."""
    (w1, _b1, g1, be1,
     w2, _b2, g2, be2,
     w3, _b3, g3, be3,
     w4, b4) = params

    def mm(a, w):
        return jnp.dot(a.astype(jnp.bfloat16), w.astype(jnp.bfloat16),
                       preferred_element_type=jnp.float32)

    def bn(h, g, b):
        mean = jnp.mean(h, axis=0, keepdims=True)
        var = jnp.maximum(jnp.mean(h * h, axis=0, keepdims=True) - mean * mean, 0.0)
        scale = jax.lax.rsqrt(var + BN_EPS) * g
        return h * scale + (b - mean * scale)

    h = jnp.maximum(bn(mm(x, w1), g1, be1), 0.0)
    h = jnp.maximum(bn(mm(h, w2), g2, be2), 0.0)
    h = jnp.maximum(bn(mm(h, w3), g3, be3), 0.0)
    return jnp.tanh(mm(h, w4) + b4)


if __name__ == "__main__":
    input_size = 32
    output_size = 16
    batch = 8  # training-mode BatchNorm needs B > 1

    key = jax.random.PRNGKey(0)
    kx, kp = jax.random.split(key)
    x = jax.random.normal(kx, (batch, input_size), jnp.float32)
    params = init_params(kp, input_size, output_size)

    out = jax.block_until_ready(model_gx_forward(x, params))
    assert out.shape == (batch, output_size)

    # Tight check against a reference that emulates the kernel's bf16 numerics.
    ref_bf16 = reference_forward_bf16(x, params)
    assert jnp.allclose(out, ref_bf16, atol=1e-2, rtol=1e-2), \
        "mismatch vs bf16-emulating reference"

    # Loose sanity check against the faithful f32 PyTorch-semantics reference
    # (tolerance accounts for bf16 matmul operands).
    ref_f32 = reference_forward(x, params)
    assert jnp.allclose(out, ref_f32, atol=1.5e-1, rtol=1.5e-1), \
        "mismatch vs f32 reference"

    print("KERNEL_OK")
</pallas_src>

<mosaic_0001>
module attributes {stable_mosaic.version = 11 : i64} {
  func.func @_linear_stats_kernel(%arg0: i32, %arg1: memref<8x32xf32, #tpu.memory_space<vmem>>, %arg2: memref<32x256xbf16, #tpu.memory_space<vmem>>, %arg3: memref<8x256xf32, #tpu.memory_space<vmem>>, %arg4: memref<1x1x256xf32, #tpu.memory_space<vmem>>, %arg5: memref<1x1x256xf32, #tpu.memory_space<vmem>>) attributes {dimension_semantics = [#tpu.dimension_semantics<parallel>], iteration_bounds = array<i64: 1>, scalar_prefetch = 0 : i64, scratch_operands = 0 : i64, tpu.core_type = #tpu.core_type<tc>, window_params = [{transform_indices = @transform_0, window_bounds = array<i64: 8, 32>}, {pipeline_mode = #tpu.pipeline_mode<synchronous>, transform_indices = @transform_1, window_bounds = array<i64: 32, 256>}, {transform_indices = @transform_2, window_bounds = array<i64: 8, 256>}, {transform_indices = @transform_3, window_bounds = array<i64: 1, 1, 256>}, {transform_indices = @transform_4, window_bounds = array<i64: 1, 1, 256>}]} {
    %c0 = arith.constant 0 : index
    %c0_0 = arith.constant 0 : index
    %0 = vector.load %arg1[%c0, %c0_0] : memref<8x32xf32, #tpu.memory_space<vmem>>, vector<8x32xf32>
    %1 = arith.truncf %0 : vector<8x32xf32> to vector<8x32xbf16>
    %c0_1 = arith.constant 0 : index
    %c0_2 = arith.constant 0 : index
    %2 = vector.load %arg2[%c0_1, %c0_2] : memref<32x256xbf16, #tpu.memory_space<vmem>>, vector<32x256xbf16>
    %cst = arith.constant dense<0.000000e+00> : vector<8x256xf32>
    %3 = tpu.matmul %1, %2, %cst {dimension_numbers = #tpu.dot_dimension_numbers<[1], [0], [0], [1], [0, 0, 1, 1], [], []>} : vector<8x32xbf16>, vector<32x256xbf16>, vector<8x256xf32> -> vector<8x256xf32>
    %c0_3 = arith.constant 0 : index
    %c0_4 = arith.constant 0 : index
    %4 = vector.load %arg3[%c0_3, %c0_4] : memref<8x256xf32, #tpu.memory_space<vmem>>, vector<8x256xf32>
    tpu.vector_store %arg3[%c0_3, %c0_4], %3 {strides = array<i32>} : memref<8x256xf32, #tpu.memory_space<vmem>>, vector<8x256xf32>,
    %cst_5 = arith.constant dense<0.000000e+00> : vector<256xf32>
    %5 = vector.multi_reduction <add>, %3, %cst_5 [0] : vector<8x256xf32> to vector<256xf32>
    %6 = vector.shape_cast %5 : vector<256xf32> to vector<1x256xf32>
    %c0_6 = arith.constant 0 : index
    %c0_7 = arith.constant 0 : index
    %c0_8 = arith.constant 0 : index
    %7 = vector.load %arg4[%c0_6, %c0_7, %c0_8] : memref<1x1x256xf32, #tpu.memory_space<vmem>>, vector<1x1x256xf32>
    %8 = vector.shape_cast %7 : vector<1x1x256xf32> to vector<1x256xf32>
    %9 = vector.shape_cast %6 : vector<1x256xf32> to vector<1x1x256xf32>
    tpu.vector_store %arg4[%c0_6, %c0_7, %c0_8], %9 {strides = array<i32>} : memref<1x1x256xf32, #tpu.memory_space<vmem>>, vector<1x1x256xf32>,
    %10 = arith.mulf %3, %3 : vector<8x256xf32>
    %cst_9 = arith.constant dense<0.000000e+00> : vector<256xf32>
    %11 = vector.multi_reduction <add>, %10, %cst_9 [0] : vector<8x256xf32> to vector<256xf32>
    %12 = vector.shape_cast %11 : vector<256xf32> to vector<1x256xf32>
    %c0_10 = arith.constant 0 : index
    %c0_11 = arith.constant 0 : index
    %c0_12 = arith.constant 0 : index
    %13 = vector.load %arg5[%c0_10, %c0_11, %c0_12] : memref<1x1x256xf32, #tpu.memory_space<vmem>>, vector<1x1x256xf32>
    %14 = vector.shape_cast %13 : vector<1x1x256xf32> to vector<1x256xf32>
    %15 = vector.shape_cast %12 : vector<1x256xf32> to vector<1x1x256xf32>
    tpu.vector_store %arg5[%c0_10, %c0_11, %c0_12], %15 {strides = array<i32>} : memref<1x1x256xf32, #tpu.memory_space<vmem>>, vector<1x1x256xf32>,
    return
  }
  func.func @transform_0(%arg0: i32) -> (i32, i32) {
    %c0_i32 = arith.constant 0 : i32
    %c0_i32_0 = arith.constant 0 : i32
    return %arg0, %c0_i32 : i32, i32
  }
  func.func @transform_1(%arg0: i32) -> (i32, i32) {
    %c0_i32 = arith.constant 0 : i32
    %c0_i32_0 = arith.constant 0 : i32
    %c0_i32_1 = arith.constant 0 : i32
    return %c0_i32, %c0_i32_0 : i32, i32
  }
  func.func @transform_2(%arg0: i32) -> (i32, i32) {
    %c0_i32 = arith.constant 0 : i32
    %c0_i32_0 = arith.constant 0 : i32
    return %arg0, %c0_i32 : i32, i32
  }
  func.func @transform_3(%arg0: i32) -> (i32, i32, i32) {
    %c0_i32 = arith.constant 0 : i32
    %c0_i32_0 = arith.constant 0 : i32
    %c0_i32_1 = arith.constant 0 : i32
    return %arg0, %c0_i32, %c0_i32_0 : i32, i32, i32
  }
  func.func @transform_4(%arg0: i32) -> (i32, i32, i32) {
    %c0_i32 = arith.constant 0 : i32
    %c0_i32_0 = arith.constant 0 : i32
    %c0_i32_1 = arith.constant 0 : i32
    return %arg0, %c0_i32, %c0_i32_0 : i32, i32, i32
  }
}

</mosaic_0001>

<llo_original>
// kernel: tpu_custom_call.1
$region0: #{tpu_custom_call.1}
  #allocation0 [shape = 'u32[]', space=smem, size = 0x4, offset = 0x4, fixed_abs, tag = 'smem constant byte address 0x4 - core index']
  #allocation1 [shape = 'u32[144,128]{1,0:T(1,128)}', space=vmem, size = 0x12000, scoped, tag = 'internal scratch']
  %s0 = inlined_call_operand.hbm [shape: f32[8,32], index: 0, kind: input, shape index: {}]
  %s1 = inlined_call_operand.hbm [shape: bf16[32,256], index: 1, kind: input, shape index: {}]
  %s2 = inlined_call_operand.hbm [shape: f32[8,256], index: 2, kind: output, shape index: {0}]
  %s3 = inlined_call_operand.hbm [shape: f32[1,1,256], index: 3, kind: output, shape index: {1}]
  %s4 = inlined_call_operand.hbm [shape: f32[1,1,256], index: 4, kind: output, shape index: {2}]
  %5 = xla_tuple %s2, %s3, %s4
  %s6 = sld [smem:[#allocation0]]
  $region42: #{tpu_custom_call.1} parent=0
    _
  %s8 = ssub.s32 1, %s6
  %s9 = scalar_select 0, %s8, %s6
  $region1: #{tpu_custom_call.1} parent=0
    #allocation2 [shape = 'u8[4096]{0}', space=vmem, size = 0x1000, scoped, tag = 'input window, operand 0, single buffered']
    #allocation3 [shape = 's32[1]{0}', space=sflag, size = 0x4, scoped, tag = 'scoped memory for tpu_custom_call.1']
    #allocation4 [shape = 's32[1]{0}', space=sflag, size = 0x4, scoped, tag = 'scoped memory for tpu_custom_call.1']
    #allocation5 [shape = 'u8[16384]{0}', space=vmem, size = 0x4000, scoped, tag = 'input window, operand 1, single buffered']
    #allocation6 [shape = 's32[1]{0}', space=sflag, size = 0x4, scoped, tag = 'scoped memory for tpu_custom_call.1']
    #allocation7 [shape = 'u8[8192]{0}', space=vmem, size = 0x2000, scoped, tag = 'output window, operand 0, single buffered']
    #allocation8 [shape = 'u8[1024]{0}', space=vmem, size = 0x400, scoped, tag = 'output window, operand 1, single buffered']
    #allocation9 [shape = 's32[1]{0}', space=sflag, size = 0x4, scoped, tag = 'scoped memory for tpu_custom_call.1']
    #allocation10 [shape = 'u8[1024]{0}', space=vmem, size = 0x400, scoped, tag = 'output window, operand 2, single buffered']
    %10 = vsyncpa [#allocation3], 0
    %11 = vsyncpa [#allocation6], 0
    %12 = vsyncpa [#allocation4], 0
    %13 = vsyncpa [#allocation9], 0
    // Predicated region
    $region2: #{tpu_custom_call.1} parent=1 // pred_check
      _
    $region3: #{tpu_custom_call.1} parent=1 // pred_check_branch
      %15 = sbr.rel (0) target = $region5
    $region4: #{tpu_custom_call.1} parent=1 // pred_region
      %s17 = ssub.s32 128, 128
      %18 = vsyncadd [#allocation3], %s17
      %s20 = sshll.u32 [#allocation2], 4
      %s21 = int_to_ptr.vmem [resolvable:$true] %s20
      %23 = dma.hbm_to_vmem [thread:$0]  %s0, 128, %s21, [#allocation3]
    $region5: #{tpu_custom_call.1} parent=1 // pred_fallthru
      _
    // Predicated region
    $region6: #{tpu_custom_call.1} parent=1 // pred_check
      _
    $region7: #{tpu_custom_call.1} parent=1 // pred_check_branch
      %25 = sbr.rel (0) target = $region9
    $region8: #{tpu_custom_call.1} parent=1 // pred_region
      %s27 = ssub.s32 512, 512
      %28 = vsyncadd [#allocation6], %s27
      %s29 = sshll.u32 [#allocation5], 4
      %s30 = int_to_ptr.vmem [resolvable:$true] %s29
      %35 = dma.hbm_to_vmem [thread:$0]  %s1, 512, %s30, [#allocation6], 128, 128, 8
    $region9: #{tpu_custom_call.1} parent=1 // pred_fallthru
      _
    // Predicated region
    $region10: #{tpu_custom_call.1} parent=1 // pred_check
      _
    $region11: #{tpu_custom_call.1} parent=1 // pred_check_branch
      %37 = sbr.rel (0) target = $region13
    $region12: #{tpu_custom_call.1} parent=1 // pred_region
      %38 = dma.done [#allocation3], 128
    $region13: #{tpu_custom_call.1} parent=1 // pred_fallthru
      _
    // Predicated region
    $region14: #{tpu_custom_call.1} parent=1 // pred_check
      _
    $region15: #{tpu_custom_call.1} parent=1 // pred_check_branch
      %40 = sbr.rel (0) target = $region17
    $region16: #{tpu_custom_call.1} parent=1 // pred_region
      %41 = dma.done [#allocation6], 512
    $region17: #{tpu_custom_call.1} parent=1 // pred_fallthru
      _
    %v43 = vld [vmem:[#allocation2] sm:$0xff]
    %v44 = vpack.c.bf16 %v43, %v43
    %v45 = vld [vmem:[#allocation5] sm:$0xff]
    %v46 = vld [vmem:[#allocation5 + $0x8] sm:$0xff]
    %v47 = vld [vmem:[#allocation5 + $0x10] sm:$0xff]
    %v48 = vld [vmem:[#allocation5 + $0x18] sm:$0xff]
    %v53 = vunpack.c.l.b16 %v45
    %v54 = vunpack.c.h.b16 %v45
    %v55 = vunpack.c.l.b16 %v46
    %v56 = vunpack.c.h.b16 %v46
    %v57 = vunpack.c.l.b16 %v47
    %v58 = vunpack.c.h.b16 %v47
    %v59 = vunpack.c.l.b16 %v48
    %v60 = vunpack.c.h.b16 %v48
    %v61 = vpack.c.b16 %v55, %v53
    %v62 = vpack.c.b16 %v56, %v54
    %v63 = vpack.c.b16 %v59, %v57
    %v64 = vpack.c.b16 %v60, %v58
    %vm69 = vcmask 261120
    %v71 = vsel %vm69, %v44, 0
    %73 = vmatprep.subr.bf16.mxu0 %v62
    %74 = vmatpush1.bf16.msra.mxu0 %v61
    %75 = vmatprep.subr.bf16.mxu0 %v64
    %76 = vmatpush1.bf16.msra.mxu0 %v63
    %77 = vmatprep.subr.bf16.mxu0 0
    %78 = vmatpush1.bf16.msra.mxu0 0
    %79 = vmatprep.subr.bf16.mxu0 0
    %80 = vmatpush1.bf16.msra.mxu0 0
    %81 = vmatprep.subr.bf16.mxu0 0
    %82 = vmatpush1.bf16.msra.mxu0 0
    %83 = vmatprep.subr.bf16.mxu0 0
    %84 = vmatpush1.bf16.msra.mxu0 0
    %85 = vmatprep.subr.bf16.mxu0 0
    %86 = vmatpush1.bf16.msra.mxu0 0
    %87 = vmatprep.subr.bf16.mxu0 0
    %88 = vmatpush1.bf16.msra.mxu0 0
    %89 = vmatprep.subr.bf16.mxu0 0
    %90 = vmatpush1.bf16.msra.mxu0 0
    %91 = vmatprep.subr.bf16.mxu0 0
    %92 = vmatpush1.bf16.msra.mxu0 0
    %93 = vmatprep.subr.bf16.mxu0 0
    %94 = vmatpush1.bf16.msra.mxu0 0
    %95 = vmatprep.subr.bf16.mxu0 0
    %96 = vmatpush1.bf16.msra.mxu0 0
    %97 = vmatprep.subr.bf16.mxu0 0
    %98 = vmatpush1.bf16.msra.mxu0 0
    %99 = vmatprep.subr.bf16.mxu0 0
    %100 = vmatpush1.bf16.msra.mxu0 0
    %101 = vmatprep.subr.bf16.mxu0 0
    %102 = vmatpush1.bf16.msra.mxu0 0
    %103 = vmatprep.subr.bf16.mxu0 0
    %104 = vmatpush1.bf16.msra.mxu0 0
    %105 = vmatprep.mubr.bf16.mxu0 0
    %106 = vmatmul.mubr.bf16.gmra.mrb[0].mxu0 %v71
    %v107 = vpop.f32.mrb[0].mxu0
    %v108 = vadd.f32 0.0, %v107
    %v109 = vpop.f32.mrb[0].mxu0
    %v110 = vadd.f32 0.0, %v109
    %v111 = vpop.f32.mrb[0].mxu0
    %v112 = vpop.f32.mrb[0].mxu0
    %113 = vdwg.mxu0
    %114 = vst [vmem:[#allocation7] sm:$0xff] %v108
    %115 = vst [vmem:[#allocation7 + $0x8] sm:$0xff] %v110
    %v116 = vrot.slane %v108, 4
    %v117 = vadd.f32 %v108, %v116
    %v118 = vrot.slane %v117, 2
    %v119 = vadd.f32 %v117, %v118
    %v120 = vrot.slane %v119, 1
    %v121 = vadd.f32 %v119, %v120
    %v122 = vrot.slane %v110, 4
    %v123 = vadd.f32 %v110, %v122
    %v124 = vrot.slane %v123, 2
    %v125 = vadd.f32 %v123, %v124
    %v126 = vrot.slane %v125, 1
    %v127 = vadd.f32 %v125, %v126
    %v130 = vcombine.low %v121, %v127
    %v132 = vunpack.c.l.s4 1966171168
    %v133 = vunpack.c.0.s8 %v132
    %v134 = vlaneseq
    %v135 = vshrl.u32 %v134, 7
    %v136 = vsub.s32 %v133, %v135
    %v137 = vrot.slane %v130, %v136
    %v139 = vunpack.c.l.s4 1966171168
    %v140 = vunpack.c.0.s8 %v139
    %v141 = vlaneseq
    %v142 = vshrl.u32 %v141, 7
    %v143 = vsub.s32 %v140, %v142
    %v144 = vrot.slane %v137, %v143
    %v146 = vlaneseq
    %vm147 = vcmp.ge.s32.totalorder %v146, 0
    %vm148 = vcmp.lt.s32.totalorder %v146, 256
    %vm149 = vmand %vm147, %vm148
    %150 = vst.msk [vmem:[#allocation8] sm:$0x3] %vm149, %v144
    %v151 = vmul.f32 %v108, %v108
    %v152 = vmul.f32 %v110, %v110
    %v153 = vrot.slane %v151, 4
    %v154 = vadd.f32 %v151, %v153
    %v155 = vrot.slane %v154, 2
    %v156 = vadd.f32 %v154, %v155
    %v157 = vrot.slane %v156, 1
    %v158 = vadd.f32 %v156, %v157
    %v159 = vrot.slane %v152, 4
    %v160 = vadd.f32 %v152, %v159
    %v161 = vrot.slane %v160, 2
    %v162 = vadd.f32 %v160, %v161
    %v163 = vrot.slane %v162, 1
    %v164 = vadd.f32 %v162, %v163
    %v167 = vcombine.low %v158, %v164
    %v169 = vunpack.c.l.s4 1966171168
    %v170 = vunpack.c.0.s8 %v169
    %v171 = vlaneseq
    %v172 = vshrl.u32 %v171, 7
    %v173 = vsub.s32 %v170, %v172
    %v174 = vrot.slane %v167, %v173
    %v176 = vunpack.c.l.s4 1966171168
    %v177 = vunpack.c.0.s8 %v176
    %v178 = vlaneseq
    %v179 = vshrl.u32 %v178, 7
    %v180 = vsub.s32 %v177, %v179
    %v181 = vrot.slane %v174, %v180
    %183 = vst.msk [vmem:[#allocation10] sm:$0x3] %vm149, %v181
    // Predicated region
    $region18: #{tpu_custom_call.1} parent=1 // pred_check
      _
    $region19: #{tpu_custom_call.1} parent=1 // pred_check_branch
      %185 = sbr.rel (0) target = $region21
    $region20: #{tpu_custom_call.1} parent=1 // pred_region
      %s187 = ssub.s32 256, 256
      %188 = vsyncadd [#allocation4], %s187
      %s190 = sshll.u32 [#allocation7], 4
      %s191 = int_to_ptr.vmem [resolvable:$true] %s190
      %193 = dma.vmem_to_hbm [thread:$0]  %s191, 256, %s2, [#allocation4]
    $region21: #{tpu_custom_call.1} parent=1 // pred_fallthru
      _
    // Predicated region
    $region22: #{tpu_custom_call.1} parent=1 // pred_check
      _
    $region23: #{tpu_custom_call.1} parent=1 // pred_check_branch
      %195 = sbr.rel (0) target = $region25
    $region24: #{tpu_custom_call.1} parent=1 // pred_region
      %s197 = ssub.s32 32, 32
      %198 = vsyncadd [#allocation9], %s197
      %s200 = sshll.u32 [#allocation8], 4
      %s201 = int_to_ptr.vmem [resolvable:$true] %s200
      %203 = dma.vmem_to_hbm [thread:$0]  %s201, 32, %s3, [#allocation9]
    $region25: #{tpu_custom_call.1} parent=1 // pred_fallthru
      _
    // Predicated region
    $region26: #{tpu_custom_call.1} parent=1 // pred_check
      _
    $region27: #{tpu_custom_call.1} parent=1 // pred_check_branch
      %205 = sbr.rel (0) target = $region29
    $region28: #{tpu_custom_call.1} parent=1 // pred_region
      %s207 = ssub.s32 32, 32
      %208 = vsyncadd [#allocation9], %s207
      %s210 = sshll.u32 [#allocation10], 4
      %s211 = int_to_ptr.vmem [resolvable:$true] %s210
      %213 = dma.vmem_to_hbm [thread:$0]  %s211, 32, %s4, [#allocation9]
    $region29: #{tpu_custom_call.1} parent=1 // pred_fallthru
      _
    // Predicated region
    $region30: #{tpu_custom_call.1} parent=1 // pred_check
      _
    $region31: #{tpu_custom_call.1} parent=1 // pred_check_branch
      %215 = sbr.rel (0) target = $region33
    $region32: #{tpu_custom_call.1} parent=1 // pred_region
      %216 = dma.done [#allocation4], 256
    $region33: #{tpu_custom_call.1} parent=1 // pred_fallthru
      _
    // Predicated region
    $region34: #{tpu_custom_call.1} parent=1 // pred_check
      _
    $region35: #{tpu_custom_call.1} parent=1 // pred_check_branch
      %218 = sbr.rel (0) target = $region37
    $region36: #{tpu_custom_call.1} parent=1 // pred_region
      %219 = dma.done [#allocation9], 32
    $region37: #{tpu_custom_call.1} parent=1 // pred_fallthru
      _
    // Predicated region
    $region38: #{tpu_custom_call.1} parent=1 // pred_check
      _
    $region39: #{tpu_custom_call.1} parent=1 // pred_check_branch
      %221 = sbr.rel (0) target = $region41
    $region40: #{tpu_custom_call.1} parent=1 // pred_region
      %222 = dma.done [#allocation9], 32
    $region41: #{tpu_custom_call.1} parent=1 // pred_fallthru
      _
    %223 = vsyncpa [#allocation3], 1
    %224 = vsyncpa [#allocation6], 1
    %225 = vsyncpa [#allocation4], 1
    %226 = vsyncpa [#allocation9], 1

</llo_original>
